<compile_context>
chip_gen: v5e
topology: v5e:2x2
jax: 0.10.0
libtpu: 0.0.40
codegen_flags: <defaults>
</compile_context>

<pallas_src>
import jax
import jax.numpy as jnp
from jax.experimental import pallas as pl
from jax.experimental.pallas import tpu as pltpu


def _round_up(x, m):
    return (x + m - 1) // m * m


# ----------------------------- Pallas kernel ------------------------------ #
def _linear_probe_kernel(x_ref, enc_ref, w_ref, b_ref, out_ref):
    # x_ref:   [TM, CHW]   (one batch tile, flattened NCHW)
    # enc_ref: [CHW, D]    (encoder stand-in projection, VMEM-resident)
    # w_ref:   [D, C_PAD]  (fc weight, transposed + lane-padded to 128)
    # b_ref:   [1, C_PAD]  (fc bias, lane-padded to 128)
    # out_ref: [TM, C_PAD]
    feats = jnp.dot(x_ref[...], enc_ref[...], preferred_element_type=jnp.float32)
    logits = jnp.dot(feats, w_ref[...], preferred_element_type=jnp.float32)
    out_ref[...] = (logits + b_ref[...]).astype(out_ref.dtype)


# ------------------------------- wrapper ----------------------------------- #
def linear_probe_forward(x, enc_proj, fc_weight, fc_bias, *, tm=512):
    """Fused LinearProbe forward: (flatten(x) @ enc_proj) @ fc_weight.T + fc_bias.

    x:         [B, C, H, W] float32 (NCHW, like PyTorch)
    enc_proj:  [C*H*W, D]   float32 (deterministic encoder stand-in)
    fc_weight: [num_classes, D] float32 (PyTorch nn.Linear layout)
    fc_bias:   [num_classes]    float32
    returns:   [B, num_classes] float32
    """
    B = x.shape[0]
    x_flat = x.reshape(B, -1).astype(jnp.float32)          # [B, CHW]
    CHW = x_flat.shape[1]
    D = enc_proj.shape[1]
    num_classes = fc_weight.shape[0]

    # Lane-dense output: pad classes to 128 (zero columns), slice after.
    C_PAD = 128
    w_t = jnp.zeros((D, C_PAD), dtype=jnp.float32).at[:, :num_classes].set(
        fc_weight.astype(jnp.float32).T)
    b2 = jnp.zeros((1, C_PAD), dtype=jnp.float32).at[0, :num_classes].set(
        fc_bias.astype(jnp.float32))

    # Batch tiling: TM multiple of 8, pad B up to a multiple of TM.
    TM = min(_round_up(tm, 8), _round_up(B, 8))
    B_pad = _round_up(B, TM)
    if B_pad != B:
        x_flat = jnp.pad(x_flat, ((0, B_pad - B), (0, 0)))  # zero rows -> bias only

    out_padded = pl.pallas_call(
        _linear_probe_kernel,
        out_shape=jax.ShapeDtypeStruct((B_pad, C_PAD), jnp.float32),
        grid_spec=pl.GridSpec(
            grid=(B_pad // TM,),
            in_specs=[
                pl.BlockSpec((TM, CHW), lambda i: (i, 0)),      # x tile (pipelined)
                pl.BlockSpec((CHW, D), lambda i: (0, 0)),       # enc_proj (resident)
                pl.BlockSpec((D, C_PAD), lambda i: (0, 0)),     # fc weight (resident)
                pl.BlockSpec((1, C_PAD), lambda i: (0, 0)),     # fc bias (resident)
            ],
            out_specs=pl.BlockSpec((TM, C_PAD), lambda i: (i, 0)),
        ),
        compiler_params=pltpu.CompilerParams(
            dimension_semantics=("parallel",)),
    )(x_flat, enc_proj.astype(jnp.float32), w_t, b2)

    return out_padded[:B, :num_classes]


# --------------------------- encoder stand-in (reference) ------------------ #
def encoder_encode_ref(x, enc_proj):
    """Plain-JAX reference for the frozen encoder stand-in."""
    B = x.shape[0]
    flat = x.reshape(B, -1)
    return jax.lax.stop_gradient(flat @ enc_proj)


if __name__ == "__main__":
    # Small deterministic example consistent with the module: D=128, 10 classes.
    B, C, H, W = 2, 4, 16, 16
    D, NUM_CLASSES = 128, 10

    key = jax.random.PRNGKey(0)
    k_x, k_enc, k_w, k_b = jax.random.split(key, 4)

    # input (NCHW, like PyTorch)
    x = jax.random.normal(k_x, (B, C, H, W), dtype=jnp.float32)

    # encoder stand-in projection: [C*H*W, D]
    enc_proj = jax.random.normal(k_enc, (C * H * W, D), dtype=jnp.float32) * 0.02

    # nn.Linear(D, num_classes) init: U(-1/sqrt(D), 1/sqrt(D)) for weight & bias
    bound = 1.0 / jnp.sqrt(jnp.float32(D))
    fc_weight = jax.random.uniform(
        k_w, (NUM_CLASSES, D), minval=-bound, maxval=bound, dtype=jnp.float32)
    fc_bias = jax.random.uniform(
        k_b, (NUM_CLASSES,), minval=-bound, maxval=bound, dtype=jnp.float32)

    out = linear_probe_forward(x, enc_proj, fc_weight, fc_bias)
    out = jax.block_until_ready(out)

    # correctness check against plain JAX reference
    feats_ref = encoder_encode_ref(x, enc_proj)
    ref = feats_ref @ fc_weight.T + fc_bias
    assert out.shape == (B, NUM_CLASSES)
    assert jnp.allclose(out, ref, atol=1e-4, rtol=1e-4)

    print("KERNEL_OK")
</pallas_src>

<mosaic_0001>
module attributes {stable_mosaic.version = 11 : i64} {
  func.func @_linear_probe_kernel(%arg0: i32, %arg1: memref<8x1024xf32, #tpu.memory_space<vmem>>, %arg2: memref<1024x128xf32, #tpu.memory_space<vmem>>, %arg3: memref<128x128xf32, #tpu.memory_space<vmem>>, %arg4: memref<1x128xf32, #tpu.memory_space<vmem>>, %arg5: memref<8x128xf32, #tpu.memory_space<vmem>>) attributes {dimension_semantics = [#tpu.dimension_semantics<parallel>], iteration_bounds = array<i64: 1>, scalar_prefetch = 0 : i64, scratch_operands = 0 : i64, tpu.core_type = #tpu.core_type<tc>, window_params = [{transform_indices = @transform_0, window_bounds = array<i64: 8, 1024>}, {pipeline_mode = #tpu.pipeline_mode<synchronous>, transform_indices = @transform_1, window_bounds = array<i64: 1024, 128>}, {pipeline_mode = #tpu.pipeline_mode<synchronous>, transform_indices = @transform_2, window_bounds = array<i64: 128, 128>}, {pipeline_mode = #tpu.pipeline_mode<synchronous>, transform_indices = @transform_3, window_bounds = array<i64: 1, 128>}, {transform_indices = @transform_4, window_bounds = array<i64: 8, 128>}]} {
    %c0 = arith.constant 0 : index
    %c0_0 = arith.constant 0 : index
    %0 = vector.load %arg1[%c0, %c0_0] : memref<8x1024xf32, #tpu.memory_space<vmem>>, vector<8x1024xf32>
    %c0_1 = arith.constant 0 : index
    %c0_2 = arith.constant 0 : index
    %1 = vector.load %arg2[%c0_1, %c0_2] : memref<1024x128xf32, #tpu.memory_space<vmem>>, vector<1024x128xf32>
    %cst = arith.constant dense<0.000000e+00> : vector<8x128xf32>
    %2 = tpu.matmul %0, %1, %cst {dimension_numbers = #tpu.dot_dimension_numbers<[1], [0], [0], [1], [0, 0, 1, 1], [], []>} : vector<8x1024xf32>, vector<1024x128xf32>, vector<8x128xf32> -> vector<8x128xf32>
    %c0_3 = arith.constant 0 : index
    %c0_4 = arith.constant 0 : index
    %3 = vector.load %arg3[%c0_3, %c0_4] : memref<128x128xf32, #tpu.memory_space<vmem>>, vector<128x128xf32>
    %cst_5 = arith.constant dense<0.000000e+00> : vector<8x128xf32>
    %4 = tpu.matmul %2, %3, %cst_5 {dimension_numbers = #tpu.dot_dimension_numbers<[1], [0], [0], [1], [0, 0, 1, 1], [], []>} : vector<8x128xf32>, vector<128x128xf32>, vector<8x128xf32> -> vector<8x128xf32>
    %c0_6 = arith.constant 0 : index
    %c0_7 = arith.constant 0 : index
    %5 = vector.load %arg4[%c0_6, %c0_7] : memref<1x128xf32, #tpu.memory_space<vmem>>, vector<1x128xf32>
    %6 = vector.broadcast %5 : vector<1x128xf32> to vector<8x128xf32>
    %7 = arith.addf %4, %6 : vector<8x128xf32>
    %c0_8 = arith.constant 0 : index
    %c0_9 = arith.constant 0 : index
    %8 = vector.load %arg5[%c0_8, %c0_9] : memref<8x128xf32, #tpu.memory_space<vmem>>, vector<8x128xf32>
    tpu.vector_store %arg5[%c0_8, %c0_9], %7 {strides = array<i32>} : memref<8x128xf32, #tpu.memory_space<vmem>>, vector<8x128xf32>,
    return
  }
  func.func @transform_0(%arg0: i32) -> (i32, i32) {
    %c0_i32 = arith.constant 0 : i32
    %c0_i32_0 = arith.constant 0 : i32
    return %arg0, %c0_i32 : i32, i32
  }
  func.func @transform_1(%arg0: i32) -> (i32, i32) {
    %c0_i32 = arith.constant 0 : i32
    %c0_i32_0 = arith.constant 0 : i32
    %c0_i32_1 = arith.constant 0 : i32
    return %c0_i32, %c0_i32_0 : i32, i32
  }
  func.func @transform_2(%arg0: i32) -> (i32, i32) {
    %c0_i32 = arith.constant 0 : i32
    %c0_i32_0 = arith.constant 0 : i32
    %c0_i32_1 = arith.constant 0 : i32
    return %c0_i32, %c0_i32_0 : i32, i32
  }
  func.func @transform_3(%arg0: i32) -> (i32, i32) {
    %c0_i32 = arith.constant 0 : i32
    %c0_i32_0 = arith.constant 0 : i32
    %c0_i32_1 = arith.constant 0 : i32
    return %c0_i32, %c0_i32_0 : i32, i32
  }
  func.func @transform_4(%arg0: i32) -> (i32, i32) {
    %c0_i32 = arith.constant 0 : i32
    %c0_i32_0 = arith.constant 0 : i32
    return %arg0, %c0_i32 : i32, i32
  }
}

</mosaic_0001>

<llo_original>
// kernel: tpu_custom_call.1
$region0: #{tpu_custom_call.1}
  #allocation0 [shape = 'u32[]', space=smem, size = 0x4, offset = 0x4, fixed_abs, tag = 'smem constant byte address 0x4 - core index']
  #allocation1 [shape = 'u32[72,128]{1,0:T(1,128)}', space=vmem, size = 0x9000, scoped, tag = 'internal scratch']
  %s0 = inlined_call_operand.hbm [shape: f32[8,1024], index: 0, kind: input, shape index: {}]
  %s1 = inlined_call_operand.hbm [shape: f32[1024,128], index: 1, kind: input, shape index: {}]
  %s2 = inlined_call_operand.hbm [shape: f32[128,128], index: 2, kind: input, shape index: {}]
  %s3 = inlined_call_operand.vmem [shape: f32[1,128], index: 3, kind: input, shape index: {}]
  %s4 = inlined_call_operand.hbm [shape: f32[8,128], index: 4, kind: output, shape index: {}]
  %s5 = sld [smem:[#allocation0]]
  $region38: #{tpu_custom_call.1} parent=0
    _
  %s7 = ssub.s32 1, %s5
  %s8 = scalar_select 0, %s7, %s5
  $region1: #{tpu_custom_call.1} parent=0
    #allocation2 [shape = 'u8[32768]{0}', space=vmem, size = 0x8000, scoped, tag = 'input window, operand 0, single buffered']
    #allocation3 [shape = 's32[1]{0}', space=sflag, size = 0x4, scoped, tag = 'scoped memory for tpu_custom_call.1']
    #allocation4 [shape = 's32[1]{0}', space=sflag, size = 0x4, scoped, tag = 'scoped memory for tpu_custom_call.1']
    #allocation5 [shape = 'u8[524288]{0}', space=vmem, size = 0x80000, scoped, tag = 'input window, operand 1, single buffered']
    #allocation6 [shape = 's32[1]{0}', space=sflag, size = 0x4, scoped, tag = 'scoped memory for tpu_custom_call.1']
    #allocation7 [shape = 'u8[65536]{0}', space=vmem, size = 0x10000, scoped, tag = 'input window, operand 2, single buffered']
    #allocation8 [shape = 'u8[4096]{0}', space=vmem, size = 0x1000, scoped, tag = 'output window, operand 0, single buffered']
    %9 = vsyncpa [#allocation3], 0
    %10 = vsyncpa [#allocation6], 0
    %11 = vsyncpa [#allocation4], 0
    // Predicated region
    $region2: #{tpu_custom_call.1} parent=1 // pred_check
      _
    $region3: #{tpu_custom_call.1} parent=1 // pred_check_branch
      %13 = sbr.rel (0) target = $region5
    $region4: #{tpu_custom_call.1} parent=1 // pred_region
      %15 = vsyncadd [#allocation3], 0
      %s17 = sshll.u32 %s0, 4
      %s18 = int_to_ptr.hbm [resolvable:$true] %s17
      %s19 = sshll.u32 [#allocation2], 4
      %s20 = int_to_ptr.vmem [resolvable:$true] %s19
      %22 = dma.hbm_to_vmem [thread:$0]  %s18, 1024, %s20, [#allocation3]
    $region5: #{tpu_custom_call.1} parent=1 // pred_fallthru
      _
    // Predicated region
    $region6: #{tpu_custom_call.1} parent=1 // pred_check
      _
    $region7: #{tpu_custom_call.1} parent=1 // pred_check_branch
      %24 = sbr.rel (0) target = $region9
    $region8: #{tpu_custom_call.1} parent=1 // pred_region
      %26 = vsyncadd [#allocation6], 0
      %s27 = sshll.u32 %s1, 4
      %s28 = int_to_ptr.hbm [resolvable:$true] %s27
      %s29 = sshll.u32 [#allocation5], 4
      %s30 = int_to_ptr.vmem [resolvable:$true] %s29
      %35 = dma.hbm_to_vmem [thread:$0]  %s28, 16384, %s30, [#allocation6], 128, 128, 8
    $region9: #{tpu_custom_call.1} parent=1 // pred_fallthru
      _
    // Predicated region
    $region10: #{tpu_custom_call.1} parent=1 // pred_check
      _
    $region11: #{tpu_custom_call.1} parent=1 // pred_check_branch
      %37 = sbr.rel (0) target = $region13
    $region12: #{tpu_custom_call.1} parent=1 // pred_region
      %39 = vsyncadd [#allocation6], 0
      %s40 = sshll.u32 %s2, 4
      %s41 = int_to_ptr.hbm [resolvable:$true] %s40
      %s42 = sshll.u32 [#allocation7], 4
      %s43 = int_to_ptr.vmem [resolvable:$true] %s42
      %48 = dma.hbm_to_vmem [thread:$0]  %s41, 2048, %s43, [#allocation6], 128, 128, 8
    $region13: #{tpu_custom_call.1} parent=1 // pred_fallthru
      _
    // Predicated region
    $region14: #{tpu_custom_call.1} parent=1 // pred_check
      _
    $region15: #{tpu_custom_call.1} parent=1 // pred_check_branch
      %50 = sbr.rel (0) target = $region17
    $region16: #{tpu_custom_call.1} parent=1 // pred_region
      _
    $region17: #{tpu_custom_call.1} parent=1 // pred_fallthru
      _
    // Predicated region
    $region18: #{tpu_custom_call.1} parent=1 // pred_check
      _
    $region19: #{tpu_custom_call.1} parent=1 // pred_check_branch
      %52 = sbr.rel (0) target = $region21
    $region20: #{tpu_custom_call.1} parent=1 // pred_region
      %54 = dma.done [#allocation3], 1024
    $region21: #{tpu_custom_call.1} parent=1 // pred_fallthru
      _
    // Predicated region
    $region22: #{tpu_custom_call.1} parent=1 // pred_check
      _
    $region23: #{tpu_custom_call.1} parent=1 // pred_check_branch
      %56 = sbr.rel (0) target = $region25
    $region24: #{tpu_custom_call.1} parent=1 // pred_region
      %58 = dma.done [#allocation6], 16384
    $region25: #{tpu_custom_call.1} parent=1 // pred_fallthru
      _
    // Predicated region
    $region26: #{tpu_custom_call.1} parent=1 // pred_check
      _
    $region27: #{tpu_custom_call.1} parent=1 // pred_check_branch
      %60 = sbr.rel (0) target = $region29
    $region28: #{tpu_custom_call.1} parent=1 // pred_region
      %62 = dma.done [#allocation6], 2048
    $region29: #{tpu_custom_call.1} parent=1 // pred_fallthru
      _
    %v63 = vld [vmem:[#allocation2] sm:$0xff]
    %v64 = vld [vmem:[#allocation2 + $0x8] sm:$0xff]
    %v65 = vld [vmem:[#allocation2 + $0x10] sm:$0xff]
    %v66 = vld [vmem:[#allocation2 + $0x18] sm:$0xff]
    %v67 = vld [vmem:[#allocation2 + $0x20] sm:$0xff]
    %v68 = vld [vmem:[#allocation2 + $0x28] sm:$0xff]
    %v69 = vld [vmem:[#allocation2 + $0x30] sm:$0xff]
    %v70 = vld [vmem:[#allocation2 + $0x38] sm:$0xff]
    %v71 = vld [vmem:[#allocation5] sm:$0xff]
    %v72 = vld [vmem:[#allocation5 + $0x8] sm:$0xff]
    %v73 = vld [vmem:[#allocation5 + $0x10] sm:$0xff]
    %v74 = vld [vmem:[#allocation5 + $0x18] sm:$0xff]
    %v75 = vld [vmem:[#allocation5 + $0x20] sm:$0xff]
    %v76 = vld [vmem:[#allocation5 + $0x28] sm:$0xff]
    %v77 = vld [vmem:[#allocation5 + $0x30] sm:$0xff]
    %v78 = vld [vmem:[#allocation5 + $0x38] sm:$0xff]
    %v79 = vld [vmem:[#allocation5 + $0x40] sm:$0xff]
    %v80 = vld [vmem:[#allocation5 + $0x48] sm:$0xff]
    %v81 = vld [vmem:[#allocation5 + $0x50] sm:$0xff]
    %v82 = vld [vmem:[#allocation5 + $0x58] sm:$0xff]
    %v83 = vld [vmem:[#allocation5 + $0x60] sm:$0xff]
    %v84 = vld [vmem:[#allocation5 + $0x68] sm:$0xff]
    %v85 = vld [vmem:[#allocation5 + $0x70] sm:$0xff]
    %v86 = vld [vmem:[#allocation5 + $0x78] sm:$0xff]
    %v87 = vld [vmem:[#allocation5 + $0x80] sm:$0xff]
    %v88 = vld [vmem:[#allocation5 + $0x88] sm:$0xff]
    %v89 = vld [vmem:[#allocation5 + $0x90] sm:$0xff]
    %v90 = vld [vmem:[#allocation5 + $0x98] sm:$0xff]
    %v91 = vld [vmem:[#allocation5 + $0xa0] sm:$0xff]
    %v92 = vld [vmem:[#allocation5 + $0xa8] sm:$0xff]
    %v93 = vld [vmem:[#allocation5 + $0xb0] sm:$0xff]
    %v94 = vld [vmem:[#allocation5 + $0xb8] sm:$0xff]
    %v95 = vld [vmem:[#allocation5 + $0xc0] sm:$0xff]
    %v96 = vld [vmem:[#allocation5 + $0xc8] sm:$0xff]
    %v97 = vld [vmem:[#allocation5 + $0xd0] sm:$0xff]
    %v98 = vld [vmem:[#allocation5 + $0xd8] sm:$0xff]
    %v99 = vld [vmem:[#allocation5 + $0xe0] sm:$0xff]
    %v100 = vld [vmem:[#allocation5 + $0xe8] sm:$0xff]
    %v101 = vld [vmem:[#allocation5 + $0xf0] sm:$0xff]
    %v102 = vld [vmem:[#allocation5 + $0xf8] sm:$0xff]
    %v103 = vld [vmem:[#allocation5 + $0x100] sm:$0xff]
    %v104 = vld [vmem:[#allocation5 + $0x108] sm:$0xff]
    %v105 = vld [vmem:[#allocation5 + $0x110] sm:$0xff]
    %v106 = vld [vmem:[#allocation5 + $0x118] sm:$0xff]
    %v107 = vld [vmem:[#allocation5 + $0x120] sm:$0xff]
    %v108 = vld [vmem:[#allocation5 + $0x128] sm:$0xff]
    %v109 = vld [vmem:[#allocation5 + $0x130] sm:$0xff]
    %v110 = vld [vmem:[#allocation5 + $0x138] sm:$0xff]
    %v111 = vld [vmem:[#allocation5 + $0x140] sm:$0xff]
    %v112 = vld [vmem:[#allocation5 + $0x148] sm:$0xff]
    %v113 = vld [vmem:[#allocation5 + $0x150] sm:$0xff]
    %v114 = vld [vmem:[#allocation5 + $0x158] sm:$0xff]
    %v115 = vld [vmem:[#allocation5 + $0x160] sm:$0xff]
    %v116 = vld [vmem:[#allocation5 + $0x168] sm:$0xff]
    %v117 = vld [vmem:[#allocation5 + $0x170] sm:$0xff]
    %v118 = vld [vmem:[#allocation5 + $0x178] sm:$0xff]
    %v119 = vld [vmem:[#allocation5 + $0x180] sm:$0xff]
    %v120 = vld [vmem:[#allocation5 + $0x188] sm:$0xff]
    %v121 = vld [vmem:[#allocation5 + $0x190] sm:$0xff]
    %v122 = vld [vmem:[#allocation5 + $0x198] sm:$0xff]
    %v123 = vld [vmem:[#allocation5 + $0x1a0] sm:$0xff]
    %v124 = vld [vmem:[#allocation5 + $0x1a8] sm:$0xff]
    %v125 = vld [vmem:[#allocation5 + $0x1b0] sm:$0xff]
    %v126 = vld [vmem:[#allocation5 + $0x1b8] sm:$0xff]
    %v127 = vld [vmem:[#allocation5 + $0x1c0] sm:$0xff]
    %v128 = vld [vmem:[#allocation5 + $0x1c8] sm:$0xff]
    %v129 = vld [vmem:[#allocation5 + $0x1d0] sm:$0xff]
    %v130 = vld [vmem:[#allocation5 + $0x1d8] sm:$0xff]
    %v131 = vld [vmem:[#allocation5 + $0x1e0] sm:$0xff]
    %v132 = vld [vmem:[#allocation5 + $0x1e8] sm:$0xff]
    %v133 = vld [vmem:[#allocation5 + $0x1f0] sm:$0xff]
    %v134 = vld [vmem:[#allocation5 + $0x1f8] sm:$0xff]
    %v135 = vld [vmem:[#allocation5 + $0x200] sm:$0xff]
    %v136 = vld [vmem:[#allocation5 + $0x208] sm:$0xff]
    %v137 = vld [vmem:[#allocation5 + $0x210] sm:$0xff]
    %v138 = vld [vmem:[#allocation5 + $0x218] sm:$0xff]
    %v139 = vld [vmem:[#allocation5 + $0x220] sm:$0xff]
    %v140 = vld [vmem:[#allocation5 + $0x228] sm:$0xff]
    %v141 = vld [vmem:[#allocation5 + $0x230] sm:$0xff]
    %v142 = vld [vmem:[#allocation5 + $0x238] sm:$0xff]
    %v143 = vld [vmem:[#allocation5 + $0x240] sm:$0xff]
    %v144 = vld [vmem:[#allocation5 + $0x248] sm:$0xff]
    %v145 = vld [vmem:[#allocation5 + $0x250] sm:$0xff]
    %v146 = vld [vmem:[#allocation5 + $0x258] sm:$0xff]
    %v147 = vld [vmem:[#allocation5 + $0x260] sm:$0xff]
    %v148 = vld [vmem:[#allocation5 + $0x268] sm:$0xff]
    %v149 = vld [vmem:[#allocation5 + $0x270] sm:$0xff]
    %v150 = vld [vmem:[#allocation5 + $0x278] sm:$0xff]
    %v151 = vld [vmem:[#allocation5 + $0x280] sm:$0xff]
    %v152 = vld [vmem:[#allocation5 + $0x288] sm:$0xff]
    %v153 = vld [vmem:[#allocation5 + $0x290] sm:$0xff]
    %v154 = vld [vmem:[#allocation5 + $0x298] sm:$0xff]
    %v155 = vld [vmem:[#allocation5 + $0x2a0] sm:$0xff]
    %v156 = vld [vmem:[#allocation5 + $0x2a8] sm:$0xff]
    %v157 = vld [vmem:[#allocation5 + $0x2b0] sm:$0xff]
    %v158 = vld [vmem:[#allocation5 + $0x2b8] sm:$0xff]
    %v159 = vld [vmem:[#allocation5 + $0x2c0] sm:$0xff]
    %v160 = vld [vmem:[#allocation5 + $0x2c8] sm:$0xff]
    %v161 = vld [vmem:[#allocation5 + $0x2d0] sm:$0xff]
    %v162 = vld [vmem:[#allocation5 + $0x2d8] sm:$0xff]
    %v163 = vld [vmem:[#allocation5 + $0x2e0] sm:$0xff]
    %v164 = vld [vmem:[#allocation5 + $0x2e8] sm:$0xff]
    %v165 = vld [vmem:[#allocation5 + $0x2f0] sm:$0xff]
    %v166 = vld [vmem:[#allocation5 + $0x2f8] sm:$0xff]
    %v167 = vld [vmem:[#allocation5 + $0x300] sm:$0xff]
    %v168 = vld [vmem:[#allocation5 + $0x308] sm:$0xff]
    %v169 = vld [vmem:[#allocation5 + $0x310] sm:$0xff]
    %v170 = vld [vmem:[#allocation5 + $0x318] sm:$0xff]
    %v171 = vld [vmem:[#allocation5 + $0x320] sm:$0xff]
    %v172 = vld [vmem:[#allocation5 + $0x328] sm:$0xff]
    %v173 = vld [vmem:[#allocation5 + $0x330] sm:$0xff]
    %v174 = vld [vmem:[#allocation5 + $0x338] sm:$0xff]
    %v175 = vld [vmem:[#allocation5 + $0x340] sm:$0xff]
    %v176 = vld [vmem:[#allocation5 + $0x348] sm:$0xff]
    %v177 = vld [vmem:[#allocation5 + $0x350] sm:$0xff]
    %v178 = vld [vmem:[#allocation5 + $0x358] sm:$0xff]
    %v179 = vld [vmem:[#allocation5 + $0x360] sm:$0xff]
    %v180 = vld [vmem:[#allocation5 + $0x368] sm:$0xff]
    %v181 = vld [vmem:[#allocation5 + $0x370] sm:$0xff]
    %v182 = vld [vmem:[#allocation5 + $0x378] sm:$0xff]
    %v183 = vld [vmem:[#allocation5 + $0x380] sm:$0xff]
    %v184 = vld [vmem:[#allocation5 + $0x388] sm:$0xff]
    %v185 = vld [vmem:[#allocation5 + $0x390] sm:$0xff]
    %v186 = vld [vmem:[#allocation5 + $0x398] sm:$0xff]
    %v187 = vld [vmem:[#allocation5 + $0x3a0] sm:$0xff]
    %v188 = vld [vmem:[#allocation5 + $0x3a8] sm:$0xff]
    %v189 = vld [vmem:[#allocation5 + $0x3b0] sm:$0xff]
    %v190 = vld [vmem:[#allocation5 + $0x3b8] sm:$0xff]
    %v191 = vld [vmem:[#allocation5 + $0x3c0] sm:$0xff]
    %v192 = vld [vmem:[#allocation5 + $0x3c8] sm:$0xff]
    %v193 = vld [vmem:[#allocation5 + $0x3d0] sm:$0xff]
    %v194 = vld [vmem:[#allocation5 + $0x3d8] sm:$0xff]
    %v195 = vld [vmem:[#allocation5 + $0x3e0] sm:$0xff]
    %v196 = vld [vmem:[#allocation5 + $0x3e8] sm:$0xff]
    %v197 = vld [vmem:[#allocation5 + $0x3f0] sm:$0xff]
    %v198 = vld [vmem:[#allocation5 + $0x3f8] sm:$0xff]
    %199 = vmatpush.msra.mxu0 %v86
    %200 = vmatpush.msra.mxu0 %v85
    %201 = vmatpush.msra.mxu0 %v84
    %202 = vmatpush.msra.mxu0 %v83
    %203 = vmatpush.msra.mxu0 %v82
    %204 = vmatpush.msra.mxu0 %v81
    %205 = vmatpush.msra.mxu0 %v80
    %206 = vmatpush.msra.mxu0 %v79
    %207 = vmatpush.msra.mxu0 %v78
    %208 = vmatpush.msra.mxu0 %v77
    %209 = vmatpush.msra.mxu0 %v76
    %210 = vmatpush.msra.mxu0 %v75
    %211 = vmatpush.msra.mxu0 %v74
    %212 = vmatpush.msra.mxu0 %v73
    %213 = vmatpush.msra.mxu0 %v72
    %214 = vmatpush.msra.mxu0 %v71
    %215 = vmatmul.f32.gmra.mxu0 %v63
    %v216 = vpop.f32.mrf.mxu0
    %v217 = vadd.f32 0.0, %v216
    %218 = vdwg.mxu0
    %219 = vmatpush.msra.mxu0 %v102
    %220 = vmatpush.msra.mxu0 %v101
    %221 = vmatpush.msra.mxu0 %v100
    %222 = vmatpush.msra.mxu0 %v99
    %223 = vmatpush.msra.mxu0 %v98
    %224 = vmatpush.msra.mxu0 %v97
    %225 = vmatpush.msra.mxu0 %v96
    %226 = vmatpush.msra.mxu0 %v95
    %227 = vmatpush.msra.mxu0 %v94
    %228 = vmatpush.msra.mxu0 %v93
    %229 = vmatpush.msra.mxu0 %v92
    %230 = vmatpush.msra.mxu0 %v91
    %231 = vmatpush.msra.mxu0 %v90
    %232 = vmatpush.msra.mxu0 %v89
    %233 = vmatpush.msra.mxu0 %v88
    %234 = vmatpush.msra.mxu0 %v87
    %235 = vmatmul.f32.gmra.mxu0 %v64
    %v236 = vpop.f32.mrf.mxu0
    %v237 = vadd.f32 %v217, %v236
    %238 = vdwg.mxu0
    %239 = vmatpush.msra.mxu0 %v118
    %240 = vmatpush.msra.mxu0 %v117
    %241 = vmatpush.msra.mxu0 %v116
    %242 = vmatpush.msra.mxu0 %v115
    %243 = vmatpush.msra.mxu0 %v114
    %244 = vmatpush.msra.mxu0 %v113
    %245 = vmatpush.msra.mxu0 %v112
    %246 = vmatpush.msra.mxu0 %v111
    %247 = vmatpush.msra.mxu0 %v110
    %248 = vmatpush.msra.mxu0 %v109
    %249 = vmatpush.msra.mxu0 %v108
    %250 = vmatpush.msra.mxu0 %v107
    %251 = vmatpush.msra.mxu0 %v106
    %252 = vmatpush.msra.mxu0 %v105
    %253 = vmatpush.msra.mxu0 %v104
    %254 = vmatpush.msra.mxu0 %v103
    %255 = vmatmul.f32.gmra.mxu0 %v65
    %v256 = vpop.f32.mrf.mxu0
    %v257 = vadd.f32 %v237, %v256
    %258 = vdwg.mxu0
    %259 = vmatpush.msra.mxu0 %v134
    %260 = vmatpush.msra.mxu0 %v133
    %261 = vmatpush.msra.mxu0 %v132
    %262 = vmatpush.msra.mxu0 %v131
    %263 = vmatpush.msra.mxu0 %v130
    %264 = vmatpush.msra.mxu0 %v129
    %265 = vmatpush.msra.mxu0 %v128
    %266 = vmatpush.msra.mxu0 %v127
    %267 = vmatpush.msra.mxu0 %v126
    %268 = vmatpush.msra.mxu0 %v125
    %269 = vmatpush.msra.mxu0 %v124
    %270 = vmatpush.msra.mxu0 %v123
    %271 = vmatpush.msra.mxu0 %v122
    %272 = vmatpush.msra.mxu0 %v121
    %273 = vmatpush.msra.mxu0 %v120
    %274 = vmatpush.msra.mxu0 %v119
    %275 = vmatmul.f32.gmra.mxu0 %v66
    %v276 = vpop.f32.mrf.mxu0
    %v277 = vadd.f32 %v257, %v276
    %278 = vdwg.mxu0
    %279 = vmatpush.msra.mxu0 %v150
    %280 = vmatpush.msra.mxu0 %v149
    %281 = vmatpush.msra.mxu0 %v148
    %282 = vmatpush.msra.mxu0 %v147
    %283 = vmatpush.msra.mxu0 %v146
    %284 = vmatpush.msra.mxu0 %v145
    %285 = vmatpush.msra.mxu0 %v144
    %286 = vmatpush.msra.mxu0 %v143
    %287 = vmatpush.msra.mxu0 %v142
    %288 = vmatpush.msra.mxu0 %v141
    %289 = vmatpush.msra.mxu0 %v140
    %290 = vmatpush.msra.mxu0 %v139
    %291 = vmatpush.msra.mxu0 %v138
    %292 = vmatpush.msra.mxu0 %v137
    %293 = vmatpush.msra.mxu0 %v136
    %294 = vmatpush.msra.mxu0 %v135
    %295 = vmatmul.f32.gmra.mxu0 %v67
    %v296 = vpop.f32.mrf.mxu0
    %v297 = vadd.f32 %v277, %v296
    %298 = vdwg.mxu0
    %299 = vmatpush.msra.mxu0 %v166
    %300 = vmatpush.msra.mxu0 %v165
    %301 = vmatpush.msra.mxu0 %v164
    %302 = vmatpush.msra.mxu0 %v163
    %303 = vmatpush.msra.mxu0 %v162
    %304 = vmatpush.msra.mxu0 %v161
    %305 = vmatpush.msra.mxu0 %v160
    %306 = vmatpush.msra.mxu0 %v159
    %307 = vmatpush.msra.mxu0 %v158
    %308 = vmatpush.msra.mxu0 %v157
    %309 = vmatpush.msra.mxu0 %v156
    %310 = vmatpush.msra.mxu0 %v155
    %311 = vmatpush.msra.mxu0 %v154
    %312 = vmatpush.msra.mxu0 %v153
    %313 = vmatpush.msra.mxu0 %v152
    %314 = vmatpush.msra.mxu0 %v151
    %315 = vmatmul.f32.gmra.mxu0 %v68
    %v316 = vpop.f32.mrf.mxu0
    %v317 = vadd.f32 %v297, %v316
    %318 = vdwg.mxu0
    %319 = vmatpush.msra.mxu0 %v182
    %320 = vmatpush.msra.mxu0 %v181
    %321 = vmatpush.msra.mxu0 %v180
    %322 = vmatpush.msra.mxu0 %v179
    %323 = vmatpush.msra.mxu0 %v178
    %324 = vmatpush.msra.mxu0 %v177
    %325 = vmatpush.msra.mxu0 %v176
    %326 = vmatpush.msra.mxu0 %v175
    %327 = vmatpush.msra.mxu0 %v174
    %328 = vmatpush.msra.mxu0 %v173
    %329 = vmatpush.msra.mxu0 %v172
    %330 = vmatpush.msra.mxu0 %v171
    %331 = vmatpush.msra.mxu0 %v170
    %332 = vmatpush.msra.mxu0 %v169
    %333 = vmatpush.msra.mxu0 %v168
    %334 = vmatpush.msra.mxu0 %v167
    %335 = vmatmul.f32.gmra.mxu0 %v69
    %v336 = vpop.f32.mrf.mxu0
    %v337 = vadd.f32 %v317, %v336
    %338 = vdwg.mxu0
    %339 = vmatpush.msra.mxu0 %v198
    %340 = vmatpush.msra.mxu0 %v197
    %341 = vmatpush.msra.mxu0 %v196
    %342 = vmatpush.msra.mxu0 %v195
    %343 = vmatpush.msra.mxu0 %v194
    %344 = vmatpush.msra.mxu0 %v193
    %345 = vmatpush.msra.mxu0 %v192
    %346 = vmatpush.msra.mxu0 %v191
    %347 = vmatpush.msra.mxu0 %v190
    %348 = vmatpush.msra.mxu0 %v189
    %349 = vmatpush.msra.mxu0 %v188
    %350 = vmatpush.msra.mxu0 %v187
    %351 = vmatpush.msra.mxu0 %v186
    %352 = vmatpush.msra.mxu0 %v185
    %353 = vmatpush.msra.mxu0 %v184
    %354 = vmatpush.msra.mxu0 %v183
    %355 = vmatmul.f32.gmra.mxu0 %v70
    %v356 = vpop.f32.mrf.mxu0
    %v357 = vadd.f32 %v337, %v356
    %358 = vdwg.mxu0
    %v359 = vld [vmem:[#allocation7] sm:$0xff]
    %v360 = vld [vmem:[#allocation7 + $0x8] sm:$0xff]
    %v361 = vld [vmem:[#allocation7 + $0x10] sm:$0xff]
    %v362 = vld [vmem:[#allocation7 + $0x18] sm:$0xff]
    %v363 = vld [vmem:[#allocation7 + $0x20] sm:$0xff]
    %v364 = vld [vmem:[#allocation7 + $0x28] sm:$0xff]
    %v365 = vld [vmem:[#allocation7 + $0x30] sm:$0xff]
    %v366 = vld [vmem:[#allocation7 + $0x38] sm:$0xff]
    %v367 = vld [vmem:[#allocation7 + $0x40] sm:$0xff]
    %v368 = vld [vmem:[#allocation7 + $0x48] sm:$0xff]
    %v369 = vld [vmem:[#allocation7 + $0x50] sm:$0xff]
    %v370 = vld [vmem:[#allocation7 + $0x58] sm:$0xff]
    %v371 = vld [vmem:[#allocation7 + $0x60] sm:$0xff]
    %v372 = vld [vmem:[#allocation7 + $0x68] sm:$0xff]
    %v373 = vld [vmem:[#allocation7 + $0x70] sm:$0xff]
    %v374 = vld [vmem:[#allocation7 + $0x78] sm:$0xff]
    %v375 = vld [vmem:[%s3] sm:$0x1]
    %v377 = vperm.slane %v375, 0
    %379 = vmatpush.msra.mxu0 %v374
    %380 = vmatpush.msra.mxu0 %v373
    %381 = vmatpush.msra.mxu0 %v372
    %382 = vmatpush.msra.mxu0 %v371
    %383 = vmatpush.msra.mxu0 %v370
    %384 = vmatpush.msra.mxu0 %v369
    %385 = vmatpush.msra.mxu0 %v368
    %386 = vmatpush.msra.mxu0 %v367
    %387 = vmatpush.msra.mxu0 %v366
    %388 = vmatpush.msra.mxu0 %v365
    %389 = vmatpush.msra.mxu0 %v364
    %390 = vmatpush.msra.mxu0 %v363
    %391 = vmatpush.msra.mxu0 %v362
    %392 = vmatpush.msra.mxu0 %v361
    %393 = vmatpush.msra.mxu0 %v360
    %394 = vmatpush.msra.mxu0 %v359
    %395 = vmatmul.f32.gmra.mxu0 %v357
    %v396 = vpop.f32.mrf.mxu0
    %v397 = vadd.f32 %v377, %v396
    %398 = vdwg.mxu0
    %399 = vst [vmem:[#allocation8] sm:$0xff] %v397
    // Predicated region
    $region30: #{tpu_custom_call.1} parent=1 // pred_check
      _
    $region31: #{tpu_custom_call.1} parent=1 // pred_check_branch
      %401 = sbr.rel (0) target = $region33
    $region32: #{tpu_custom_call.1} parent=1 // pred_region
      %403 = vsyncadd [#allocation4], 0
      %s405 = sshll.u32 [#allocation8], 4
      %s406 = int_to_ptr.vmem [resolvable:$true] %s405
      %s407 = sshll.u32 %s4, 4
      %s408 = int_to_ptr.hbm [resolvable:$true] %s407
      %410 = dma.vmem_to_hbm [thread:$0]  %s406, 128, %s408, [#allocation4]
    $region33: #{tpu_custom_call.1} parent=1 // pred_fallthru
      _
    // Predicated region
    $region34: #{tpu_custom_call.1} parent=1 // pred_check
      _
    $region35: #{tpu_custom_call.1} parent=1 // pred_check_branch
      %412 = sbr.rel (0) target = $region37
    $region36: #{tpu_custom_call.1} parent=1 // pred_region
      %414 = dma.done [#allocation4], 128
    $region37: #{tpu_custom_call.1} parent=1 // pred_fallthru
      _
    %415 = vsyncpa [#allocation3], 1
    %416 = vsyncpa [#allocation6], 1
    %417 = vsyncpa [#allocation4], 1

</llo_original>
